<compile_context>
chip_gen: v6e
topology: v6e:2x2x1
jax: 0.10.0
libtpu: 0.0.40
codegen_flags: <defaults>
</compile_context>

<pallas_src>
import functools

import jax
import jax.numpy as jnp
from jax.experimental import pallas as pl
from jax.experimental.pallas import tpu as pltpu


# ---------------------------------------------------------------------------
# Kernel
# ---------------------------------------------------------------------------
def _logreg_kernel(x_ref, w_ref, b_ref, o_ref, acc_ref, *, seq_len, seq_tile):
    # x_ref: (TB, TS, D)   w_ref: (D, 2) pre-scaled by 1/S   b_ref: (1, 2)
    # o_ref: (TB, 2)       acc_ref: (TB, D) f32 scratch accumulator
    s = pl.program_id(1)

    @pl.when(s == 0)
    def _init():
        acc_ref[...] = jnp.zeros_like(acc_ref)

    # Cast to f32 BEFORE reducing (free under the HBM roofline; fixes bf16/fp16
    # accumulation error and fp16 overflow since the raw sum is unscaled).
    xf = x_ref[...].astype(jnp.float32)

    if seq_len % seq_tile != 0:
        # Ragged last sequence tile: zero out padded (out-of-range) seq rows.
        pos = s * seq_tile + jax.lax.broadcasted_iota(jnp.int32, xf.shape, 1)
        xf = jnp.where(pos < seq_len, xf, 0.0)

    acc_ref[...] += jnp.sum(xf, axis=1)  # (TB, D) partial sum over this S tile

    @pl.when(s == pl.num_programs(1) - 1)
    def _finalize():
        # TODO(synk): dropout is identity in eval mode / p=0.0, so it is omitted.
        logits = jnp.dot(acc_ref[...], w_ref[...],
                         preferred_element_type=jnp.float32)       # (TB, 2)
        o_ref[...] = (logits + b_ref[...]).astype(o_ref.dtype)


# ---------------------------------------------------------------------------
# Tiling / VMEM policy
# ---------------------------------------------------------------------------
def _round_up(x, m):
    return ((x + m - 1) // m) * m


def _vmem_capacity_bytes():
    try:
        return int(pltpu.get_tpu_info().vmem_capacity_bytes)
    except Exception:
        # Conservative fallback = smallest generation (v7x per-TC VMEM).
        return 64 * 1024 * 1024


def _choose_tiles(B, S, D, itemsize, target_bytes):
    """Pick (batch_tile, seq_tile) so one x block is ~target_bytes."""
    row_bytes = S * D * itemsize  # one batch row, full sequence
    if 8 * row_bytes <= target_bytes:
        # Batch-only tiling: full sequence per block.
        bt = max(8, (target_bytes // row_bytes) // 8 * 8)
        bt = min(bt, _round_up(B, 8))
        return bt, S
    # Sequence tiling needed: keep 8 batch rows, tile S (multiple of 8 or full).
    st = max(8, (target_bytes // (8 * D * itemsize)) // 8 * 8)
    if st >= S:
        st = S
    return 8, st


# ---------------------------------------------------------------------------
# Wrapper
# ---------------------------------------------------------------------------
def logistic_regression(x, w, b, *, batch_tile=None, seq_tile=None):
    """x: (B, S, D), w: (D, 2), b: (2,) -> (B, 2) float32 logits."""
    B, S, D = x.shape
    itemsize = x.dtype.itemsize

    # Fold the 1/S of the mean into the tiny (D, 2) weight matrix.
    w_scaled = w.astype(jnp.float32) / jnp.float32(S)
    b2 = b.astype(jnp.float32).reshape(1, 2)

    # Generation-aware budgets (v7x: 64 MiB VMEM -> ~14 MiB tiles;
    # v5e/v6e: 128 MiB -> ~24 MiB tiles).  Leave ~25% headroom.
    cap = _vmem_capacity_bytes()
    budget = (3 * cap) // 4
    target_tile = (14 << 20) if cap <= (96 << 20) else (24 << 20)
    target_tile = min(target_tile, (budget - (2 << 20)) // 2)  # double-buffered

    auto_bt, auto_st = _choose_tiles(B, S, D, itemsize, target_tile)
    user_bt = batch_tile is not None
    if batch_tile is None:
        batch_tile = auto_bt
    if seq_tile is None:
        seq_tile = auto_st

    # v7x has 2 TensorCores: when the problem is big enough to matter, make
    # sure the "parallel" batch axis has >= 2 grid steps so both TCs stream.
    # (Extra grid steps cost ~0.35 us each -> harmless on 1-TC v5e/v6e.)
    total_x_bytes = B * S * D * itemsize
    if (not user_bt) and total_x_bytes >= (4 << 20) and B > 8:
        half = _round_up(-(-B // 2), 8)
        batch_tile = min(batch_tile, half)

    grid_b = pl.cdiv(B, batch_tile)
    grid_s = pl.cdiv(S, seq_tile)

    # VMEM limit from the actual tiles (double-buffered x, accumulator, params),
    # clamped to physical capacity.
    x_tile_bytes = batch_tile * seq_tile * D * itemsize
    acc_bytes = batch_tile * D * 4
    need = 2 * x_tile_bytes + acc_bytes + (1 << 20)
    vmem_bytes = int(min(cap, max(16 << 20, need)))

    kernel = functools.partial(_logreg_kernel, seq_len=S, seq_tile=seq_tile)

    return pl.pallas_call(
        kernel,
        out_shape=jax.ShapeDtypeStruct((B, 2), jnp.float32),
        grid_spec=pltpu.PrefetchScalarGridSpec(
            num_scalar_prefetch=0,
            grid=(grid_b, grid_s),
            in_specs=[
                pl.BlockSpec((batch_tile, seq_tile, D), lambda i, s: (i, s, 0)),
                pl.BlockSpec((D, 2), lambda i, s: (0, 0)),
                pl.BlockSpec((1, 2), lambda i, s: (0, 0)),
            ],
            out_specs=pl.BlockSpec((batch_tile, 2), lambda i, s: (i, 0)),
            scratch_shapes=[pltpu.VMEM((batch_tile, D), jnp.float32)],
        ),
        compiler_params=pltpu.CompilerParams(
            dimension_semantics=("parallel", "arbitrary"),
            vmem_limit_bytes=vmem_bytes,
        ),
    )(x, w_scaled, b2)


# ---------------------------------------------------------------------------
# Demo / self-test
# ---------------------------------------------------------------------------
if __name__ == "__main__":
    key = jax.random.PRNGKey(0)
    kx, kw, kb, kx2, kx3 = jax.random.split(key, 5)

    batch, seq, input_dim = 8, 8, 128

    x = jax.random.normal(kx, (batch, seq, input_dim), dtype=jnp.float32)
    # deterministic "Linear(input_dim, 2)" parameters (PyTorch-like uniform init)
    bound = 1.0 / jnp.sqrt(input_dim)
    w = jax.random.uniform(kw, (input_dim, 2), minval=-bound, maxval=bound,
                           dtype=jnp.float32)
    b = jax.random.uniform(kb, (2,), minval=-bound, maxval=bound,
                           dtype=jnp.float32)

    # --- 1) small demo shape: single grid step, auto tiling ---
    out = jax.block_until_ready(logistic_regression(x, w, b))
    ref = jnp.mean(x, axis=1) @ w + b
    assert out.shape == (batch, 2)
    assert jnp.allclose(out, ref, atol=1e-5, rtol=1e-5)

    # --- 2) batch-tiled path (grid_b > 1, "parallel" batch axis) ---
    big_batch = 64
    x2 = jax.random.normal(kx2, (big_batch, seq, input_dim), dtype=jnp.float32)
    out2 = jax.block_until_ready(logistic_regression(x2, w, b, batch_tile=16))
    ref2 = jnp.mean(x2, axis=1) @ w + b
    assert out2.shape == (big_batch, 2)
    assert jnp.allclose(out2, ref2, atol=1e-5, rtol=1e-5)

    # --- 3) S-tiled accumulator path with ragged last seq tile (mask) ---
    B3, S3 = 16, 24
    x3 = jax.random.normal(kx3, (B3, S3, input_dim), dtype=jnp.float32)
    out3 = jax.block_until_ready(
        logistic_regression(x3, w, b, batch_tile=8, seq_tile=16))
    ref3 = jnp.mean(x3, axis=1) @ w + b
    assert out3.shape == (B3, 2)
    assert jnp.allclose(out3, ref3, atol=1e-5, rtol=1e-5)

    # --- 4) bf16 input: f32 cast happens before the sequence reduction ---
    xb = x3.astype(jnp.bfloat16)
    out4 = jax.block_until_ready(
        logistic_regression(xb, w, b, batch_tile=8, seq_tile=16))
    ref4 = jnp.mean(xb.astype(jnp.float32), axis=1) @ w + b
    assert jnp.allclose(out4, ref4, atol=1e-4, rtol=1e-4)

    print("KERNEL_OK")
</pallas_src>

<mosaic_0001>
module attributes {stable_mosaic.version = 11 : i64} {
  func.func @_logreg_kernel(%arg0: i32, %arg1: i32, %arg2: memref<8x8x128xf32, #tpu.memory_space<vmem>>, %arg3: memref<128x2xf32, #tpu.memory_space<vmem>>, %arg4: memref<1x2xf32, #tpu.memory_space<vmem>>, %arg5: memref<8x2xf32, #tpu.memory_space<vmem>>, %arg6: memref<8x128xf32, #tpu.memory_space<vmem>>) attributes {dimension_semantics = [#tpu.dimension_semantics<parallel>, #tpu.dimension_semantics<arbitrary>], iteration_bounds = array<i64: 1, 1>, scalar_prefetch = 0 : i64, scratch_operands = 1 : i64, tpu.core_type = #tpu.core_type<tc>, window_params = [{transform_indices = @transform_0, window_bounds = array<i64: 8, 8, 128>}, {pipeline_mode = #tpu.pipeline_mode<synchronous>, transform_indices = @transform_1, window_bounds = array<i64: 128, 2>}, {pipeline_mode = #tpu.pipeline_mode<synchronous>, transform_indices = @transform_2, window_bounds = array<i64: 1, 2>}, {transform_indices = @transform_3, window_bounds = array<i64: 8, 2>}]} {
    %c0_i32 = arith.constant 0 : i32
    %0 = arith.cmpi eq, %arg1, %c0_i32 : i32
    %1 = arith.extui %0 : i1 to i32
    %c0_i32_0 = arith.constant 0 : i32
    %2 = arith.cmpi ne, %1, %c0_i32_0 : i32
    scf.if %2 {
      %cst_9 = arith.constant 0.000000e+00 : f32
      %11 = vector.broadcast %cst_9 : f32 to vector<8x128xf32>
      %c0_10 = arith.constant 0 : index
      %c0_11 = arith.constant 0 : index
      %12 = vector.load %arg6[%c0_10, %c0_11] : memref<8x128xf32, #tpu.memory_space<vmem>>, vector<8x128xf32>
      tpu.vector_store %arg6[%c0_10, %c0_11], %11 {strides = array<i32>} : memref<8x128xf32, #tpu.memory_space<vmem>>, vector<8x128xf32>,
    } else {
    }
    %c0 = arith.constant 0 : index
    %c0_1 = arith.constant 0 : index
    %c0_2 = arith.constant 0 : index
    %3 = vector.load %arg2[%c0, %c0_1, %c0_2] : memref<8x8x128xf32, #tpu.memory_space<vmem>>, vector<8x8x128xf32>
    %c0_3 = arith.constant 0 : index
    %c0_4 = arith.constant 0 : index
    %4 = vector.load %arg6[%c0_3, %c0_4] : memref<8x128xf32, #tpu.memory_space<vmem>>, vector<8x128xf32>
    %cst = arith.constant dense<0.000000e+00> : vector<8x128xf32>
    %5 = vector.multi_reduction <add>, %3, %cst [1] : vector<8x8x128xf32> to vector<8x128xf32>
    %6 = arith.addf %4, %5 : vector<8x128xf32>
    %c0_5 = arith.constant 0 : index
    %c0_6 = arith.constant 0 : index
    %7 = vector.load %arg6[%c0_5, %c0_6] : memref<8x128xf32, #tpu.memory_space<vmem>>, vector<8x128xf32>
    tpu.vector_store %arg6[%c0_5, %c0_6], %6 {strides = array<i32>} : memref<8x128xf32, #tpu.memory_space<vmem>>, vector<8x128xf32>,
    %c0_i32_7 = arith.constant 0 : i32
    %8 = arith.cmpi eq, %arg1, %c0_i32_7 : i32
    %9 = arith.extui %8 : i1 to i32
    %c0_i32_8 = arith.constant 0 : i32
    %10 = arith.cmpi ne, %9, %c0_i32_8 : i32
    scf.if %10 {
      %c0_9 = arith.constant 0 : index
      %c0_10 = arith.constant 0 : index
      %11 = vector.load %arg6[%c0_9, %c0_10] : memref<8x128xf32, #tpu.memory_space<vmem>>, vector<8x128xf32>
      %c0_11 = arith.constant 0 : index
      %c0_12 = arith.constant 0 : index
      %12 = vector.load %arg3[%c0_11, %c0_12] : memref<128x2xf32, #tpu.memory_space<vmem>>, vector<128x2xf32>
      %cst_13 = arith.constant dense<0.000000e+00> : vector<8x2xf32>
      %13 = tpu.matmul %11, %12, %cst_13 {dimension_numbers = #tpu.dot_dimension_numbers<[1], [0], [0], [1], [0, 0, 1, 1], [], []>} : vector<8x128xf32>, vector<128x2xf32>, vector<8x2xf32> -> vector<8x2xf32>
      %c0_14 = arith.constant 0 : index
      %c0_15 = arith.constant 0 : index
      %14 = vector.load %arg4[%c0_14, %c0_15] : memref<1x2xf32, #tpu.memory_space<vmem>>, vector<1x2xf32>
      %15 = vector.broadcast %14 : vector<1x2xf32> to vector<8x2xf32>
      %16 = arith.addf %13, %15 : vector<8x2xf32>
      %c0_16 = arith.constant 0 : index
      %c0_17 = arith.constant 0 : index
      %17 = vector.load %arg5[%c0_16, %c0_17] : memref<8x2xf32, #tpu.memory_space<vmem>>, vector<8x2xf32>
      tpu.vector_store %arg5[%c0_16, %c0_17], %16 {strides = array<i32>} : memref<8x2xf32, #tpu.memory_space<vmem>>, vector<8x2xf32>,
    } else {
    }
    return
  }
  func.func @transform_0(%arg0: i32, %arg1: i32) -> (i32, i32, i32) {
    %c0_i32 = arith.constant 0 : i32
    %c0_i32_0 = arith.constant 0 : i32
    return %arg0, %arg1, %c0_i32 : i32, i32, i32
  }
  func.func @transform_1(%arg0: i32, %arg1: i32) -> (i32, i32) {
    %c0_i32 = arith.constant 0 : i32
    %c0_i32_0 = arith.constant 0 : i32
    %c0_i32_1 = arith.constant 0 : i32
    return %c0_i32, %c0_i32_0 : i32, i32
  }
  func.func @transform_2(%arg0: i32, %arg1: i32) -> (i32, i32) {
    %c0_i32 = arith.constant 0 : i32
    %c0_i32_0 = arith.constant 0 : i32
    %c0_i32_1 = arith.constant 0 : i32
    return %c0_i32, %c0_i32_0 : i32, i32
  }
  func.func @transform_3(%arg0: i32, %arg1: i32) -> (i32, i32) {
    %c0_i32 = arith.constant 0 : i32
    %c0_i32_0 = arith.constant 0 : i32
    return %arg0, %c0_i32 : i32, i32
  }
}

</mosaic_0001>

<llo_original>
// kernel: tpu_custom_call.1
$region0: #{tpu_custom_call.1}
  #allocation0 [shape = 'u32[]', space=smem, size = 0x4, offset = 0x4, fixed_abs, tag = 'smem constant byte address 0x4 - core index']
  #allocation1 [shape = 'u32[144,128]{1,0:T(1,128)}', space=vmem, size = 0x12000, scoped, tag = 'internal scratch']
  #allocation2 [shape = 'f32[8,128]{1,0:T(8,128)}', space=vmem, size = 0x1000, scoped, tag = 'scratch operand']
  %s0 = inlined_call_operand.vmem [shape: f32[8,8,128], index: 0, kind: input, shape index: {}]
  %s1 = inlined_call_operand.vmem [shape: f32[128,2], index: 1, kind: input, shape index: {}]
  %s2 = inlined_call_operand.vmem [shape: f32[1,2], index: 2, kind: input, shape index: {}]
  %s3 = inlined_call_operand.vmem [shape: f32[8,2], index: 3, kind: output, shape index: {}]
  %s4 = sld [smem:[#allocation0]]
  $region30: #{tpu_custom_call.1} parent=0
    _
  %s6 = ssub.s32 1, %s4
  %s7 = scalar_select 0, %s6, %s4
  // Predicated region
  $region2: #{tpu_custom_call.1} parent=0 // pred_check
    _
  $region3: #{tpu_custom_call.1} parent=0 // pred_check_branch
    %9 = sbr.rel (0) target = $region5
  $region4: #{tpu_custom_call.1} parent=0 // pred_region
    _
  $region5: #{tpu_custom_call.1} parent=0 // pred_fallthru
    _
  // Predicated region
  $region6: #{tpu_custom_call.1} parent=0 // pred_check
    _
  $region7: #{tpu_custom_call.1} parent=0 // pred_check_branch
    %11 = sbr.rel (0) target = $region9
  $region8: #{tpu_custom_call.1} parent=0 // pred_region
    _
  $region9: #{tpu_custom_call.1} parent=0 // pred_fallthru
    _
  // Predicated region
  $region10: #{tpu_custom_call.1} parent=0 // pred_check
    _
  $region11: #{tpu_custom_call.1} parent=0 // pred_check_branch
    %13 = sbr.rel (0) target = $region13
  $region12: #{tpu_custom_call.1} parent=0 // pred_region
    _
  $region13: #{tpu_custom_call.1} parent=0 // pred_fallthru
    _
  %p14 = scmp.eq.s32.totalorder 0, 0
  // Predicated region
  $region14: #{tpu_custom_call.1} parent=0 // pred_check
    %p15 = pneg %p14
  $region15: #{tpu_custom_call.1} parent=0 // pred_check_branch
    %17 = sbr.rel (%p15) target = $region17
  $region16: #{tpu_custom_call.1} parent=0 // pred_region
    %18 = vst [vmem:[#allocation2] sm:$0xff] 0.0
  $region17: #{tpu_custom_call.1} parent=0 // pred_fallthru
    _
  %v19 = vld [vmem:[%s0] sm:$0xff]
  %v20 = vld [vmem:[%s0 + $0x8] sm:$0xff]
  %v21 = vld [vmem:[%s0 + $0x10] sm:$0xff]
  %v22 = vld [vmem:[%s0 + $0x18] sm:$0xff]
  %v23 = vld [vmem:[%s0 + $0x20] sm:$0xff]
  %v24 = vld [vmem:[%s0 + $0x28] sm:$0xff]
  %v25 = vld [vmem:[%s0 + $0x30] sm:$0xff]
  %v26 = vld [vmem:[%s0 + $0x38] sm:$0xff]
  %v27 = vld [vmem:[#allocation2] sm:$0xff]
  %v28 = vrot.slane %v19, 4
  %v29 = vadd.f32 %v19, %v28
  %v30 = vrot.slane %v29, 2
  %v31 = vadd.f32 %v29, %v30
  %v32 = vrot.slane %v31, 1
  %v33 = vadd.f32 %v31, %v32
  %v34 = vrot.slane %v20, 4
  %v35 = vadd.f32 %v20, %v34
  %v36 = vrot.slane %v35, 2
  %v37 = vadd.f32 %v35, %v36
  %v38 = vrot.slane %v37, 1
  %v39 = vadd.f32 %v37, %v38
  %v40 = vrot.slane %v21, 4
  %v41 = vadd.f32 %v21, %v40
  %v42 = vrot.slane %v41, 2
  %v43 = vadd.f32 %v41, %v42
  %v44 = vrot.slane %v43, 1
  %v45 = vadd.f32 %v43, %v44
  %v46 = vrot.slane %v22, 4
  %v47 = vadd.f32 %v22, %v46
  %v48 = vrot.slane %v47, 2
  %v49 = vadd.f32 %v47, %v48
  %v50 = vrot.slane %v49, 1
  %v51 = vadd.f32 %v49, %v50
  %v52 = vrot.slane %v23, 4
  %v53 = vadd.f32 %v23, %v52
  %v54 = vrot.slane %v53, 2
  %v55 = vadd.f32 %v53, %v54
  %v56 = vrot.slane %v55, 1
  %v57 = vadd.f32 %v55, %v56
  %v58 = vrot.slane %v24, 4
  %v59 = vadd.f32 %v24, %v58
  %v60 = vrot.slane %v59, 2
  %v61 = vadd.f32 %v59, %v60
  %v62 = vrot.slane %v61, 1
  %v63 = vadd.f32 %v61, %v62
  %v64 = vrot.slane %v25, 4
  %v65 = vadd.f32 %v25, %v64
  %v66 = vrot.slane %v65, 2
  %v67 = vadd.f32 %v65, %v66
  %v68 = vrot.slane %v67, 1
  %v69 = vadd.f32 %v67, %v68
  %v70 = vrot.slane %v26, 4
  %v71 = vadd.f32 %v26, %v70
  %v72 = vrot.slane %v71, 2
  %v73 = vadd.f32 %v71, %v72
  %v74 = vrot.slane %v73, 1
  %v75 = vadd.f32 %v73, %v74
  %vm84 = vcmask 1041409
  %v85 = vsel %vm84, %v39, %v33
  %vm86 = vcmask 1042434
  %v87 = vsel %vm86, %v45, %v85
  %vm88 = vcmask 1043459
  %v89 = vsel %vm88, %v51, %v87
  %vm90 = vcmask 1044484
  %v91 = vsel %vm90, %v57, %v89
  %vm92 = vcmask 1045509
  %v93 = vsel %vm92, %v63, %v91
  %vm94 = vcmask 1046534
  %v95 = vsel %vm94, %v69, %v93
  %vm96 = vcmask 1047559
  %v97 = vsel %vm96, %v75, %v95
  %v99 = vadd.f32 %v27, %v97
  %100 = vst [vmem:[#allocation2] sm:$0xff] %v99
  // Predicated region
  $region18: #{tpu_custom_call.1} parent=0 // pred_check
    %p101 = pneg %p14
  $region19: #{tpu_custom_call.1} parent=0 // pred_check_branch
    %103 = sbr.rel (%p101) target = $region21
  $region20: #{tpu_custom_call.1} parent=0 // pred_region
    %v104 = vld [vmem:[#allocation2] sm:$0xff]
    %v105 = vld [vmem:[%s1] sm:$0xff]
    %v106 = vld [vmem:[%s1 + $0x8] sm:$0xff]
    %v107 = vld [vmem:[%s1 + $0x10] sm:$0xff]
    %v108 = vld [vmem:[%s1 + $0x18] sm:$0xff]
    %v109 = vld [vmem:[%s1 + $0x20] sm:$0xff]
    %v110 = vld [vmem:[%s1 + $0x28] sm:$0xff]
    %v111 = vld [vmem:[%s1 + $0x30] sm:$0xff]
    %v112 = vld [vmem:[%s1 + $0x38] sm:$0xff]
    %v113 = vld [vmem:[%s1 + $0x40] sm:$0xff]
    %v114 = vld [vmem:[%s1 + $0x48] sm:$0xff]
    %v115 = vld [vmem:[%s1 + $0x50] sm:$0xff]
    %v116 = vld [vmem:[%s1 + $0x58] sm:$0xff]
    %v117 = vld [vmem:[%s1 + $0x60] sm:$0xff]
    %v118 = vld [vmem:[%s1 + $0x68] sm:$0xff]
    %v119 = vld [vmem:[%s1 + $0x70] sm:$0xff]
    %v120 = vld [vmem:[%s1 + $0x78] sm:$0xff]
    %v121 = vld [vmem:[%s2] sm:$0x1]
    %v123 = vlaneseq
    %v124 = vshrl.u32 %v123, 7
    %v125 = vsub.s32 0, %v124
    %v126 = vrot.slane %v121, %v125
    %128 = vmatprep.subr.mxu0 0.0
    %129 = vmatpush1.msra.mxu0 %v120
    %130 = vmatprep.subr.mxu0 0.0
    %131 = vmatpush1.msra.mxu0 %v119
    %132 = vmatprep.subr.mxu0 0.0
    %133 = vmatpush1.msra.mxu0 %v118
    %134 = vmatprep.subr.mxu0 0.0
    %135 = vmatpush1.msra.mxu0 %v117
    %136 = vmatprep.subr.mxu0 0.0
    %137 = vmatpush1.msra.mxu0 %v116
    %138 = vmatprep.subr.mxu0 0.0
    %139 = vmatpush1.msra.mxu0 %v115
    %140 = vmatprep.subr.mxu0 0.0
    %141 = vmatpush1.msra.mxu0 %v114
    %142 = vmatprep.subr.mxu0 0.0
    %143 = vmatpush1.msra.mxu0 %v113
    %144 = vmatprep.subr.mxu0 0.0
    %145 = vmatpush1.msra.mxu0 %v112
    %146 = vmatprep.subr.mxu0 0.0
    %147 = vmatpush1.msra.mxu0 %v111
    %148 = vmatprep.subr.mxu0 0.0
    %149 = vmatpush1.msra.mxu0 %v110
    %150 = vmatprep.subr.mxu0 0.0
    %151 = vmatpush1.msra.mxu0 %v109
    %152 = vmatprep.subr.mxu0 0.0
    %153 = vmatpush1.msra.mxu0 %v108
    %154 = vmatprep.subr.mxu0 0.0
    %155 = vmatpush1.msra.mxu0 %v107
    %156 = vmatprep.subr.mxu0 0.0
    %157 = vmatpush1.msra.mxu0 %v106
    %158 = vmatprep.subr.mxu0 0.0
    %159 = vmatpush1.msra.mxu0 %v105
    %160 = vmatprep.subr.mxu0 0.0
    %161 = vmatpush2.msra.mxu0 0.0
    %162 = vmatprep.subr.mxu0 0.0
    %163 = vmatpush2.msra.mxu0 0.0
    %164 = vmatprep.subr.mxu0 0.0
    %165 = vmatpush2.msra.mxu0 0.0
    %166 = vmatprep.subr.mxu0 0.0
    %167 = vmatpush2.msra.mxu0 0.0
    %168 = vmatprep.subr.mxu0 0.0
    %169 = vmatpush2.msra.mxu0 0.0
    %170 = vmatprep.subr.mxu0 0.0
    %171 = vmatpush2.msra.mxu0 0.0
    %172 = vmatprep.subr.mxu0 0.0
    %173 = vmatpush2.msra.mxu0 0.0
    %174 = vmatprep.subr.mxu0 0.0
    %175 = vmatpush2.msra.mxu0 0.0
    %176 = vmatprep.subr.mxu0 0.0
    %177 = vmatpush2.msra.mxu0 0.0
    %178 = vmatprep.subr.mxu0 0.0
    %179 = vmatpush2.msra.mxu0 0.0
    %180 = vmatprep.subr.mxu0 0.0
    %181 = vmatpush2.msra.mxu0 0.0
    %182 = vmatprep.subr.mxu0 0.0
    %183 = vmatpush2.msra.mxu0 0.0
    %184 = vmatprep.subr.mxu0 0.0
    %185 = vmatpush2.msra.mxu0 0.0
    %186 = vmatprep.subr.mxu0 0.0
    %187 = vmatpush2.msra.mxu0 0.0
    %188 = vmatprep.subr.mxu0 0.0
    %189 = vmatpush2.msra.mxu0 0.0
    %190 = vmatprep.subr.mxu0 0.0
    %191 = vmatpush2.msra.mxu0 0.0
    %192 = vmatprep.mubr.f32.mxu0 0.0
    %193 = vmatmul.mubr.f32.gmra.mxu0 %v104
    %v194 = vpop.f32.mrf.mxu0
    %v195 = vadd.f32 %v126, %v194
    %v196 = vpop.f32.mrf.mxu0
    %197 = vdwg.mxu0
    %vm198 = vcmask 15360
    %199 = vst.msk [vmem:[%s3] sm:$0xff] %vm198, %v195
  $region21: #{tpu_custom_call.1} parent=0 // pred_fallthru
    _
  // Predicated region
  $region22: #{tpu_custom_call.1} parent=0 // pred_check
    _
  $region23: #{tpu_custom_call.1} parent=0 // pred_check_branch
    %201 = sbr.rel (0) target = $region25
  $region24: #{tpu_custom_call.1} parent=0 // pred_region
    _
  $region25: #{tpu_custom_call.1} parent=0 // pred_fallthru
    _
  // Predicated region
  $region26: #{tpu_custom_call.1} parent=0 // pred_check
    _
  $region27: #{tpu_custom_call.1} parent=0 // pred_check_branch
    %203 = sbr.rel (0) target = $region29
  $region28: #{tpu_custom_call.1} parent=0 // pred_region
    _
  $region29: #{tpu_custom_call.1} parent=0 // pred_fallthru
    _

</llo_original>
